<compile_context>
chip_gen: v7x
topology: tpu7x:2x2x1
jax: 0.10.0
libtpu: 0.0.40
codegen_flags: <defaults>
</compile_context>

<pallas_src>
import numpy as np
import jax
import jax.numpy as jnp
from jax.experimental import pallas as pl
from jax.experimental.pallas import tpu as pltpu


def _round_up(x, m):
    return ((x + m - 1) // m) * m


# ----------------------------------------------------------------------------
# init-time geometry (mirrors compute_intersections_2d_torch in __init__)
# ----------------------------------------------------------------------------
def compute_intersections_2d(n_row, n_col, M, b, src, dst):
    """tvals: [n_ray, n_row + n_col + 2], sorted, clipped to [0, 1]."""
    Minv = jnp.linalg.inv(M)
    s_idx = (src - b[None, :]) @ Minv.T          # [n_ray, 2] (row, col) index coords
    d_idx = (dst - b[None, :]) @ Minv.T
    delta = d_idx - s_idx                        # [n_ray, 2]

    row_lines = (jnp.arange(n_row + 1, dtype=jnp.float32) - 0.5)[None, :]
    col_lines = (jnp.arange(n_col + 1, dtype=jnp.float32) - 0.5)[None, :]

    eps = jnp.float32(1e-9)
    den_r = jnp.where(jnp.abs(delta[:, 0:1]) < eps, eps, delta[:, 0:1])
    den_c = jnp.where(jnp.abs(delta[:, 1:2]) < eps, eps, delta[:, 1:2])
    t_r = (row_lines - s_idx[:, 0:1]) / den_r
    t_c = (col_lines - s_idx[:, 1:2]) / den_c
    tvals = jnp.concatenate([t_r, t_c], axis=1)
    tvals = jnp.clip(tvals, 0.0, 1.0)
    tvals = jnp.sort(tvals, axis=1)
    return tvals.astype(jnp.float32)


# ----------------------------------------------------------------------------
# Pallas forward kernel: one (ray-tile, active-pixel-tile) step of
#   sino = img @ A^T     (A^T pre-transposed, bf16 inputs, f32 accumulation)
# ----------------------------------------------------------------------------
def ct_fwd_kernel(counts_ref, tilemap_ref, img_ref, at_ref, out_ref):
    i = pl.program_id(0)        # ray tile       (parallel axis)
    p = pl.program_id(1)        # position in the compacted active-tile list

    # Output block index is constant along p -> VMEM-resident f32 accumulator.
    @pl.when(p == 0)
    def _init():
        out_ref[...] = jnp.zeros_like(out_ref)

    # Tail entries (p >= counts[i]) repeat the previous block index, so no new
    # DMA was issued for them; just skip the MXU work.
    @pl.when(p < counts_ref[i])
    def _accum():
        out_ref[...] += jax.lax.dot_general(
            img_ref[...], at_ref[...],
            dimension_numbers=(((1,), (0,)), ((), ())),   # (B,K) x (K,N)
            preferred_element_type=jnp.float32)


# ----------------------------------------------------------------------------
# Module-equivalent wrapper
# ----------------------------------------------------------------------------
class CTProjector2D:
    def __init__(self, n_row, n_col, M, b, src, dst, dtype=jnp.bfloat16):
        self.n_row, self.n_col = int(n_row), int(n_col)
        self.M, self.b, self.src, self.dst = M, b, src, dst
        self.n_ray = int(src.shape[0])
        self.rc = self.n_row * self.n_col
        self._dtype = np.dtype(dtype)

        # buffers computed in __init__ (as in the torch module)
        self.tvals = compute_intersections_2d(n_row, n_col, M, b, src, dst)

        Minv = jnp.linalg.inv(M)
        s_idx = ((src - b[None, :]) @ Minv.T).astype(jnp.float32)
        d_idx = ((dst - b[None, :]) @ Minv.T).astype(jnp.float32)
        delta = d_idx - s_idx
        rlen = jnp.linalg.norm(dst - src, axis=-1).astype(jnp.float32)
        self._src_idx, self._delta_idx, self._ray_len = s_idx, delta, rlen

        # ---- image-independent per-segment weights & pixel ids ----
        t0, t1 = self.tvals[:, :-1], self.tvals[:, 1:]
        dt, tm = t1 - t0, 0.5 * (t0 + t1)
        ridx = s_idx[:, 0:1] + tm * delta[:, 0:1]
        cidx = s_idx[:, 1:2] + tm * delta[:, 1:2]
        row = jnp.floor(ridx + 0.5).astype(jnp.int32)
        col = jnp.floor(cidx + 0.5).astype(jnp.int32)
        valid = ((dt > 0) & (row >= 0) & (row < self.n_row)
                 & (col >= 0) & (col < self.n_col))
        w = jnp.where(valid, dt * rlen[:, None], 0.0)
        pix = (jnp.clip(row, 0, self.n_row - 1) * self.n_col
               + jnp.clip(col, 0, self.n_col - 1))

        # Dense system matrix A[ray, pixel]; scatter-add merges duplicate
        # pixels along a ray.  One-time cost; forward is then a pure matmul.
        A = jnp.zeros((self.n_ray, self.rc), jnp.float32)
        A = A.at[jnp.arange(self.n_ray)[:, None], pix].add(w)

        # ---- tile sizes (multiples of 128 on lane dims) ----
        tile_pix = min(2048, _round_up(self.rc, 128))
        tile_rays = min(512, _round_up(self.n_ray, 128))
        if self.n_ray >= 256 and _round_up(self.n_ray, tile_rays) == tile_rays:
            # single ray tile but enough rays to split: keep >= 2 parallel
            # tiles so both v7x TensorCores get work.
            tile_rays = max(128, _round_up(tile_rays // 2, 128))
        self._tile_rays, self._tile_pix = tile_rays, tile_pix

        n_ray_p = _round_up(self.n_ray, tile_rays)
        rc_p = _round_up(self.rc, tile_pix)
        self._n_ray_p, self._rc_p = n_ray_p, rc_p
        nrt, npt = n_ray_p // tile_rays, rc_p // tile_pix
        self._nrt, self._npt = nrt, npt

        A_p = jnp.pad(A, ((0, n_ray_p - self.n_ray), (0, rc_p - self.rc)))

        # Pre-transposed system matrix (A^T) in the streaming dtype (bf16 by
        # default): MXU-friendly layout, half the HBM bytes.
        self._At = jnp.asarray(A_p.T, dtype=self._dtype)      # [rc_p, n_ray_p]

        # ---- compacted per-ray-tile list of active pixel tiles (real DMA
        #      skipping: inactive A^T / image tiles are never fetched) ----
        tile_mass = jnp.abs(A_p).reshape(nrt, tile_rays, npt, tile_pix).sum(axis=(1, 3))
        active = np.asarray(tile_mass > 0)                     # [nrt, npt]
        counts = active.sum(axis=1).astype(np.int32)           # [nrt]
        max_active = max(1, int(counts.max()))
        tilemap = np.zeros((nrt, max_active), np.int32)
        for r in range(nrt):
            idxs = np.nonzero(active[r])[0]
            if idxs.size:
                tilemap[r, :idxs.size] = idxs
                tilemap[r, idxs.size:] = idxs[-1]   # repeat -> no extra DMA
        self._counts = jnp.asarray(counts)                      # 1-D int32 (SMEM)
        self._tilemap = jnp.asarray(tilemap.reshape(-1))        # 1-D int32 (SMEM)
        self._max_active = max_active
        self._active_tiles = int(counts.sum())

    # ------------------------------------------------------------------ call
    def __call__(self, image):
        squeeze = image.ndim == 2
        if squeeze:
            image = image[None]
        B = int(image.shape[0])
        itemsize = int(self._dtype.itemsize)
        sublane = max(8, 32 // itemsize)             # bf16 -> 16, f32 -> 8
        B_pad = _round_up(max(B, sublane), sublane)

        img = image.reshape(B, self.rc).astype(jnp.float32)
        img = jnp.pad(img, ((0, B_pad - B), (0, self._rc_p - self.rc)))
        img = img.astype(self._dtype)

        tr, tp, ma = self._tile_rays, self._tile_pix, self._max_active
        grid = (self._nrt, ma)

        # VMEM request from the actual tile footprint; cap at 3/4 of the
        # chip's VMEM capacity (fits v7x's 64 MiB-per-TensorCore).
        tile_bytes = (2 * tr * tp * itemsize          # A^T tile (double-buffered)
                      + 2 * B_pad * tp * itemsize     # image tile (double-buffered)
                      + B_pad * tr * 4)               # resident f32 out block
        try:
            vmem_cap = int(pltpu.get_tpu_info().vmem_capacity_bytes)
        except Exception:
            vmem_cap = 64 << 20
        vmem_limit = int(min(max(4 * tile_bytes, 32 << 20), (3 * vmem_cap) // 4))

        cost = pl.CostEstimate(
            flops=2 * B_pad * tr * tp * self._active_tiles,
            transcendentals=0,
            bytes_accessed=(self._active_tiles * (tr * tp + B_pad * tp) * itemsize
                            + B_pad * self._n_ray_p * 4))

        def img_map(i, p, counts, tmap):
            return (0, tmap[i * ma + p])

        def at_map(i, p, counts, tmap):
            return (tmap[i * ma + p], i)

        def out_map(i, p, counts, tmap):
            return (0, i)

        out = pl.pallas_call(
            ct_fwd_kernel,
            out_shape=jax.ShapeDtypeStruct((B_pad, self._n_ray_p), jnp.float32),
            grid_spec=pltpu.PrefetchScalarGridSpec(
                num_scalar_prefetch=2,                # counts, tilemap -> SMEM
                grid=grid,
                in_specs=[
                    # image pixel-tile, selected by the compacted tilemap
                    pl.BlockSpec((B_pad, tp), img_map),
                    # pre-transposed system-matrix tile
                    pl.BlockSpec((tp, tr), at_map),
                ],
                # constant along p -> VMEM-resident accumulator per ray tile
                out_specs=pl.BlockSpec((B_pad, tr), out_map),
            ),
            compiler_params=pltpu.CompilerParams(
                dimension_semantics=("parallel", "arbitrary"),
                vmem_limit_bytes=vmem_limit),
            cost_estimate=cost,
        )(self._counts, self._tilemap, img, self._At)

        sino = out[:B, :self.n_ray]
        return sino[0] if squeeze else sino

    # pure-JAX reference (independent of A; same math as the torch op, f32)
    def reference(self, image):
        squeeze = image.ndim == 2
        if squeeze:
            image = image[None]
        B = image.shape[0]
        img_flat = image.reshape(B, -1).astype(jnp.float32)
        t0, t1 = self.tvals[:, :-1], self.tvals[:, 1:]
        dt, tm = t1 - t0, 0.5 * (t0 + t1)
        ridx = self._src_idx[:, 0:1] + tm * self._delta_idx[:, 0:1]
        cidx = self._src_idx[:, 1:2] + tm * self._delta_idx[:, 1:2]
        row = jnp.floor(ridx + 0.5).astype(jnp.int32)
        col = jnp.floor(cidx + 0.5).astype(jnp.int32)
        valid = ((dt > 0) & (row >= 0) & (row < self.n_row)
                 & (col >= 0) & (col < self.n_col))
        w = jnp.where(valid, dt * self._ray_len[:, None], 0.0)
        pix = (jnp.clip(row, 0, self.n_row - 1) * self.n_col
               + jnp.clip(col, 0, self.n_col - 1))
        gathered = img_flat[:, pix]                      # [B, n_ray, n_seg]
        sino = jnp.sum(gathered * w[None], axis=-1)
        return sino[0] if squeeze else sino

    # reference using the same quantized (bf16) operands as the kernel, but a
    # plain f32 matmul -> isolates kernel/indexing errors from bf16 rounding.
    def matmul_reference(self, image):
        squeeze = image.ndim == 2
        if squeeze:
            image = image[None]
        B = image.shape[0]
        img = image.reshape(B, -1).astype(jnp.float32)
        img = jnp.pad(img, ((0, 0), (0, self._rc_p - self.rc)))
        img_q = img.astype(self._dtype).astype(jnp.float32)
        at_q = self._At.astype(jnp.float32)
        sino = jnp.dot(img_q, at_q, precision=jax.lax.Precision.HIGHEST)
        sino = sino[:, :self.n_ray]
        return sino[0] if squeeze else sino


# ----------------------------------------------------------------------------
# demo / self-test
# ----------------------------------------------------------------------------
if __name__ == "__main__":
    def make_geometry(n_row, n_col, pixel, n_ang, n_det, det_spacing, L):
        M = (pixel * jnp.eye(2)).astype(jnp.float32)
        b = (-M @ jnp.array([(n_row - 1) / 2.0, (n_col - 1) / 2.0])).astype(jnp.float32)
        angles = (jnp.arange(n_ang, dtype=jnp.float32) + 0.5) * jnp.pi / n_ang
        dets = (jnp.arange(n_det, dtype=jnp.float32) - (n_det - 1) / 2.0) * det_spacing
        dirs = jnp.stack([jnp.cos(angles), jnp.sin(angles)], axis=-1)    # [n_ang, 2]
        perp = jnp.stack([-jnp.sin(angles), jnp.cos(angles)], axis=-1)
        src = (-L) * dirs[:, None, :] + dets[None, :, None] * perp[:, None, :]
        dst = (+L) * dirs[:, None, :] + dets[None, :, None] * perp[:, None, :]
        return (M, b,
                src.reshape(-1, 2).astype(jnp.float32),
                dst.reshape(-1, 2).astype(jnp.float32))

    key = jax.random.PRNGKey(0)

    configs = [
        # small shapes (16x16 image, 256 rays, batch 2): single pixel tile
        dict(n_row=16, n_col=16, pixel=0.5, n_ang=8, n_det=32,
             det_spacing=0.37, L=12.0, batch=2),
        # slightly larger (48x48 image, 768 rays, batch 3): exercises the
        # compacted tilemap path with 2 ray tiles x 2 pixel tiles
        dict(n_row=48, n_col=48, pixel=0.5, n_ang=12, n_det=64,
             det_spacing=0.41, L=20.0, batch=3),
    ]

    for cfg in configs:
        M, b, src, dst = make_geometry(cfg["n_row"], cfg["n_col"], cfg["pixel"],
                                       cfg["n_ang"], cfg["n_det"],
                                       cfg["det_spacing"], cfg["L"])
        projector = CTProjector2D(cfg["n_row"], cfg["n_col"], M, b, src, dst)

        key, sub = jax.random.split(key)
        image = jax.random.normal(sub, (cfg["batch"], cfg["n_row"], cfg["n_col"]),
                                  dtype=jnp.float32)

        sino = jax.block_until_ready(projector(image))            # [B, n_ray]
        assert sino.shape == (cfg["batch"], src.shape[0]), sino.shape

        # loose check vs full-precision reference (bounds bf16 storage error)
        sino_ref = jax.block_until_ready(projector.reference(image))
        scale = max(1.0, float(jnp.max(jnp.abs(sino_ref))))
        err = float(jnp.max(jnp.abs(sino - sino_ref)))
        assert err < 2e-2 * scale, f"kernel/reference mismatch: {err} (scale {scale})"

        # tight check vs the same-quantization matmul reference (kernel exactness)
        sino_q = jax.block_until_ready(projector.matmul_reference(image))
        scale_q = max(1.0, float(jnp.max(jnp.abs(sino_q))))
        err_q = float(jnp.max(jnp.abs(sino - sino_q)))
        assert err_q < 1e-4 * scale_q, f"kernel/quantized-ref mismatch: {err_q}"

        # unbatched path: [R, C] -> [n_ray]
        sino1 = jax.block_until_ready(projector(image[0]))
        assert sino1.shape == (src.shape[0],), sino1.shape
        err1 = float(jnp.max(jnp.abs(sino1 - sino[0])))
        assert err1 < 1e-6, f"batched/unbatched mismatch: {err1}"

    print("KERNEL_OK")
</pallas_src>

<mosaic_0001>
module attributes {stable_mosaic.version = 11 : i64} {
  func.func @ct_fwd_kernel(%arg0: i32, %arg1: i32, %arg2: memref<2xi32, #tpu.memory_space<smem>>, %arg3: memref<2xi32, #tpu.memory_space<smem>>, %arg4: memref<16x256xbf16, #tpu.memory_space<vmem>>, %arg5: memref<256x128xbf16, #tpu.memory_space<vmem>>, %arg6: memref<16x128xf32, #tpu.memory_space<vmem>>) attributes {dimension_semantics = [#tpu.dimension_semantics<parallel>, #tpu.dimension_semantics<arbitrary>], iteration_bounds = array<i64: 2, 1>, scalar_prefetch = 2 : i64, scratch_operands = 0 : i64, tpu.core_type = #tpu.core_type<tc>, window_params = [{transform_indices = @transform_0, window_bounds = array<i64: 16, 256>}, {transform_indices = @transform_1, window_bounds = array<i64: 256, 128>}, {transform_indices = @transform_2, window_bounds = array<i64: 16, 128>}]} {
    %c0_i32 = arith.constant 0 : i32
    %0 = arith.cmpi eq, %arg1, %c0_i32 : i32
    %1 = arith.extui %0 : i1 to i32
    %c0_i32_0 = arith.constant 0 : i32
    %2 = arith.cmpi ne, %1, %c0_i32_0 : i32
    scf.if %2 {
      %cst = arith.constant 0.000000e+00 : f32
      %8 = vector.broadcast %cst : f32 to vector<16x128xf32>
      %c0 = arith.constant 0 : index
      %c0_2 = arith.constant 0 : index
      %9 = vector.load %arg6[%c0, %c0_2] : memref<16x128xf32, #tpu.memory_space<vmem>>, vector<16x128xf32>
      tpu.vector_store %arg6[%c0, %c0_2], %8 {strides = array<i32>} : memref<16x128xf32, #tpu.memory_space<vmem>>, vector<16x128xf32>,
    } else {
    }
    %3 = arith.index_cast %arg0 : i32 to index
    %4 = memref.load %arg2[%3] : memref<2xi32, #tpu.memory_space<smem>>
    %5 = arith.cmpi slt, %arg1, %4 : i32
    %6 = arith.extui %5 : i1 to i32
    %c0_i32_1 = arith.constant 0 : i32
    %7 = arith.cmpi ne, %6, %c0_i32_1 : i32
    scf.if %7 {
      %c0 = arith.constant 0 : index
      %c0_2 = arith.constant 0 : index
      %8 = vector.load %arg6[%c0, %c0_2] : memref<16x128xf32, #tpu.memory_space<vmem>>, vector<16x128xf32>
      %c0_3 = arith.constant 0 : index
      %c0_4 = arith.constant 0 : index
      %9 = vector.load %arg4[%c0_3, %c0_4] : memref<16x256xbf16, #tpu.memory_space<vmem>>, vector<16x256xbf16>
      %c0_5 = arith.constant 0 : index
      %c0_6 = arith.constant 0 : index
      %10 = vector.load %arg5[%c0_5, %c0_6] : memref<256x128xbf16, #tpu.memory_space<vmem>>, vector<256x128xbf16>
      %cst = arith.constant dense<0.000000e+00> : vector<16x128xf32>
      %11 = tpu.matmul %9, %10, %cst {dimension_numbers = #tpu.dot_dimension_numbers<[1], [0], [0], [1], [0, 0, 1, 1], [], []>} : vector<16x256xbf16>, vector<256x128xbf16>, vector<16x128xf32> -> vector<16x128xf32>
      %12 = arith.addf %8, %11 : vector<16x128xf32>
      %c0_7 = arith.constant 0 : index
      %c0_8 = arith.constant 0 : index
      %13 = vector.load %arg6[%c0_7, %c0_8] : memref<16x128xf32, #tpu.memory_space<vmem>>, vector<16x128xf32>
      tpu.vector_store %arg6[%c0_7, %c0_8], %12 {strides = array<i32>} : memref<16x128xf32, #tpu.memory_space<vmem>>, vector<16x128xf32>,
    } else {
    }
    return
  }
  func.func @transform_0(%arg0: i32, %arg1: i32, %arg2: memref<2xi32, #tpu.memory_space<smem>>, %arg3: memref<2xi32, #tpu.memory_space<smem>>) -> (i32, i32) {
    %c1_i32 = arith.constant 1 : i32
    %0 = arith.muli %arg0, %c1_i32 : i32
    %1 = arith.addi %0, %arg1 : i32
    %2 = arith.index_cast %1 : i32 to index
    %3 = memref.load %arg3[%2] : memref<2xi32, #tpu.memory_space<smem>>
    %c0_i32 = arith.constant 0 : i32
    %c0_i32_0 = arith.constant 0 : i32
    return %c0_i32, %3 : i32, i32
  }
  func.func @transform_1(%arg0: i32, %arg1: i32, %arg2: memref<2xi32, #tpu.memory_space<smem>>, %arg3: memref<2xi32, #tpu.memory_space<smem>>) -> (i32, i32) {
    %c1_i32 = arith.constant 1 : i32
    %0 = arith.muli %arg0, %c1_i32 : i32
    %1 = arith.addi %0, %arg1 : i32
    %2 = arith.index_cast %1 : i32 to index
    %3 = memref.load %arg3[%2] : memref<2xi32, #tpu.memory_space<smem>>
    %c0_i32 = arith.constant 0 : i32
    return %3, %arg0 : i32, i32
  }
  func.func @transform_2(%arg0: i32, %arg1: i32, %arg2: memref<2xi32, #tpu.memory_space<smem>>, %arg3: memref<2xi32, #tpu.memory_space<smem>>) -> (i32, i32) {
    %c0_i32 = arith.constant 0 : i32
    %c0_i32_0 = arith.constant 0 : i32
    return %c0_i32, %arg0 : i32, i32
  }
}

</mosaic_0001>

<llo_original>
// kernel: tpu_custom_call.1
$region0: #{tpu_custom_call.1}
  #allocation0 [shape = 'u32[]', space=smem, size = 0x4, offset = 0x4, fixed_abs, tag = 'smem constant byte address 0x4 - core index']
  #allocation1 [shape = 'u32[144,128]{1,0:T(1,128)}', space=vmem, size = 0x12000, scoped, tag = 'internal scratch']
  #allocation2 [shape = 's32[1]{0}', space=sflag, size = 0x4, scoped, tag = 'scoped memory for tpu_custom_call.1']
  #allocation3 [shape = 'u8[512]{0}', space=smem, size = 0x200, scoped, tag = 'prefetched SMEM operand 0']
  #allocation4 [shape = 'u8[512]{0}', space=smem, size = 0x200, scoped, tag = 'prefetched SMEM operand 1']
  %s0 = inlined_call_operand.hbm [shape: s32[2], index: 0, kind: input, shape index: {}]
  %s1 = inlined_call_operand.vmem [shape: s32[2], index: 1, kind: input, shape index: {}]
  %s2 = inlined_call_operand.hbm [shape: bf16[16,256], index: 2, kind: input, shape index: {}]
  %s3 = inlined_call_operand.hbm [shape: bf16[256,256], index: 3, kind: input, shape index: {}]
  %s4 = inlined_call_operand.hbm [shape: f32[16,256], index: 4, kind: output, shape index: {}]
  %s5 = sld [smem:[#allocation0]]
  $region57: #{tpu_custom_call.1} parent=0
    _
  %s7 = ssub.s32 1, %s5
  %s8 = scalar_select 0, %s7, %s5
  %10 = dma.hbm_to_smem %s0, 16, [#allocation3], [#allocation2]
  %s11 = sshll.u32 %s1, 4
  %s12 = int_to_ptr.vmem [resolvable:$true] %s11
  %14 = dma.vmem_to_smem %s12, 16, [#allocation4], [#allocation2]
  %15 = dma.done [#allocation2], 32
  %16 = sfence
  $region1: #{tpu_custom_call.1} parent=0
    #allocation5 [shape = 'u8[16384]{0}', space=vmem, size = 0x4000, scoped, tag = 'input window, operand 2']
    #allocation6 [shape = 's32[2]{0}', space=sflag, size = 0x8, scoped, tag = 'scoped memory for tpu_custom_call.1']
    #allocation7 [shape = 's32[2]{0}', space=sflag, size = 0x8, scoped, tag = 'scoped memory for tpu_custom_call.1']
    #allocation8 [shape = 'u8[131072]{0}', space=vmem, size = 0x20000, scoped, tag = 'input window, operand 3']
    #allocation9 [shape = 's32[2]{0}', space=sflag, size = 0x8, scoped, tag = 'scoped memory for tpu_custom_call.1']
    #allocation10 [shape = 'u8[16384]{0}', space=vmem, size = 0x4000, scoped, tag = 'output window, operand 0']
    %17 = vsyncpa [#allocation6], 0
    %s18 = scalar_lea.sflag [#allocation6], 1
    %19 = vsyncpa %s18, 0
    %20 = vsyncpa [#allocation9], 0
    %s21 = scalar_lea.sflag [#allocation9], 1
    %22 = vsyncpa %s21, 0
    %23 = vsyncpa [#allocation7], 0
    %s24 = scalar_lea.sflag [#allocation7], 1
    %25 = vsyncpa %s24, 0
    loop: start=0, step=1, limit=4
    $region2: #{tpu_custom_call.1} parent=1 // loop_pre_header
      _
    $region3: #{tpu_custom_call.1} parent=1 // loop_header
      %s27 = sphi 0, %s31
      %p28 = scmp.ge.s32.totalorder %s27, 4
      %s34 = sphi 0, %s46
      %s35 = sphi 0, %s42
      %s36 = sphi 0, %s34
      %s37 = sphi 0, %s35
      %s38 = sphi 0, %s36
      %s39 = sphi 0, %s37
      %s53 = sphi 0, %s55
      %s56 = sphi 0, %s53
      %s57 = sphi 0, %s56
      %s73 = sphi 0, %s57
      %s85 = sphi 0, %s87
      %s88 = sphi 0, %s85
      %s89 = sphi 0, %s88
      %s105 = sphi 0, %s89
      %s111 = sphi 0, %s113
      %s114 = sphi 0, %s111
      %s115 = sphi 0, %s114
      %s131 = sphi 0, %s115
    $region4: #{tpu_custom_call.1} parent=1 // loop_header_branch
      %30 = sbr.rel (%p28) target = $region8
    $region5: #{tpu_custom_call.1} parent=1 // loop_body
      %s32 = ssub.s32 %s27, 1
      %s33 = ssub.s32 %s27, 2
      %s40 = sadd.s32 1, %s35
      %p41 = scmp.ge.s32.totalorder %s40, 1
      %s42 = scalar_select %p41, 0, %s40
      %s43 = sadd.s32 1, %s34
      %s44 = scalar_select %p41, %s43, %s34
      %p45 = scmp.ge.s32.totalorder %s44, 2
      %s46 = scalar_select %p45, 0, %s44
      %s47 = sadd.s32 %s34, %s35
      %s48 = sld [smem:[#allocation4 + %s47]]
      %s49 = sadd.s32 %s46, %s42
      %s50 = sld [smem:[#allocation4 + %s49]]
      %s51 = ssub.s32 %s48, %s50
      %p52 = scmp.eq.s32.totalorder %s51, 0
      %s54 = sadd.s32 %s53, 1
      %s55 = scalar_select %p52, %s53, %s54
      %p58 = pneg %p52
      %p59 = scmp.eq.s32.totalorder %s27, 1
      %p60 = por %p58, %p59
      %p61 = scmp.ne.s32.totalorder %s53, %s56
      %p62 = scmp.eq.s32.totalorder %s27, 0
      %p63 = por %p61, %p62
      %p64 = scmp.ne.s32.totalorder %s53, %s56
      %p65 = scmp.eq.s32.totalorder %s32, 1
      %p66 = por %p64, %p65
      %p67 = scmp.ne.s32.totalorder %s56, %s57
      %p68 = scmp.eq.s32.totalorder %s32, 0
      %p69 = por %p67, %p68
      %p70 = scmp.ne.s32.totalorder %s56, %s57
      %p71 = scmp.eq.s32.totalorder %s33, 1
      %p72 = por %p70, %p71
      %p74 = scmp.ne.s32.totalorder %s57, %s73
      %p75 = scmp.eq.s32.totalorder %s33, 0
      %p76 = por %p74, %p75
      %s77 = sadd.s32 %s34, %s35
      %s78 = sld [smem:[#allocation4 + %s77]]
      %s79 = sadd.s32 %s46, %s42
      %s80 = sld [smem:[#allocation4 + %s79]]
      %s81 = ssub.s32 %s78, %s80
      %s82 = ssub.s32 %s34, %s46
      %s83 = sor.u32 %s81, %s82
      %p84 = scmp.eq.s32.totalorder %s83, 0
      %s86 = sadd.s32 %s85, 1
      %s87 = scalar_select %p84, %s85, %s86
      %p90 = pneg %p84
      %p91 = scmp.eq.s32.totalorder %s27, 1
      %p92 = por %p90, %p91
      %p93 = scmp.ne.s32.totalorder %s85, %s88
      %p94 = scmp.eq.s32.totalorder %s27, 0
      %p95 = por %p93, %p94
      %p96 = scmp.ne.s32.totalorder %s85, %s88
      %p97 = scmp.eq.s32.totalorder %s32, 1
      %p98 = por %p96, %p97
      %p99 = scmp.ne.s32.totalorder %s88, %s89
      %p100 = scmp.eq.s32.totalorder %s32, 0
      %p101 = por %p99, %p100
      %p102 = scmp.ne.s32.totalorder %s88, %s89
      %p103 = scmp.eq.s32.totalorder %s33, 1
      %p104 = por %p102, %p103
      %p106 = scmp.ne.s32.totalorder %s89, %s105
      %p107 = scmp.eq.s32.totalorder %s33, 0
      %p108 = por %p106, %p107
      %s109 = ssub.s32 %s34, %s46
      %p110 = scmp.eq.s32.totalorder %s109, 0
      %s112 = sadd.s32 %s111, 1
      %s113 = scalar_select %p110, %s111, %s112
      %p116 = pneg %p110
      %p117 = scmp.eq.s32.totalorder %s27, 1
      %p118 = por %p116, %p117
      %p119 = scmp.ne.s32.totalorder %s111, %s114
      %p120 = scmp.eq.s32.totalorder %s27, 0
      %p121 = por %p119, %p120
      %p122 = scmp.ne.s32.totalorder %s111, %s114
      %p123 = scmp.eq.s32.totalorder %s32, 1
      %p124 = por %p122, %p123
      %p125 = scmp.ne.s32.totalorder %s114, %s115
      %p126 = scmp.eq.s32.totalorder %s32, 0
      %p127 = por %p125, %p126
      %p128 = scmp.ne.s32.totalorder %s114, %s115
      %p129 = scmp.eq.s32.totalorder %s33, 1
      %p130 = por %p128, %p129
      %p132 = scmp.ne.s32.totalorder %s115, %s131
      %p133 = scmp.eq.s32.totalorder %s33, 0
      %p134 = por %p132, %p133
      %p135 = scmp.le.s32.totalorder 1, %s27
      %p136 = scmp.lt.s32.totalorder %s27, 3
      %p137 = pnand %p135, %p136
      %p138 = pneg %p137
      // Predicated region
      $region9: #{tpu_custom_call.1} parent=5 // pred_check
        _
      $region10: #{tpu_custom_call.1} parent=5 // pred_check_branch
        %140 = sbr.rel (%p137) target = $region12
      $region11: #{tpu_custom_call.1} parent=5 // pred_region
        %s141 = ssub.s32 %s27, 1
      $region12: #{tpu_custom_call.1} parent=5 // pred_fallthru
        _
      %p142 = scmp.lt.s32.totalorder %s27, 2
      // Predicated region
      $region13: #{tpu_custom_call.1} parent=5 // pred_check
        %p143 = pneg %p142
      $region14: #{tpu_custom_call.1} parent=5 // pred_check_branch
        %145 = sbr.rel (%p143) target = $region16
      $region15: #{tpu_custom_call.1} parent=5 // pred_region
        // Predicated region
        $region17: #{tpu_custom_call.1} parent=15 // pred_check
          %p146 = pneg %p63
        $region18: #{tpu_custom_call.1} parent=15 // pred_check_branch
          %148 = sbr.rel (%p146) target = $region20
        $region19: #{tpu_custom_call.1} parent=15 // pred_region
          %s149 = sand.u32 %s53, 1
          %s150 = scalar_lea.sflag [#allocation6], %s149
          %s151 = sand.u32 %s53, 1
          %s152 = smul.addr %s151, 16
          %s153 = scalar_lea.vmem [#allocation5], %s152
          %s154 = sadd.s32 %s34, %s35
          %s155 = sld [smem:[#allocation4 + %s154]]
          %s156 = smul.u32 2, %s155
          %s158 = ssub.s32 256, 256
          %159 = vsyncadd %s150, %s158
          %s160 = smul.addr %s156, 64
          %s161 = scalar_lea.hbm %s2, %s160
          %s162 = sshll.u32 %s153, 4
          %s163 = int_to_ptr.vmem [resolvable:$true] %s162
          %168 = dma.hbm_to_vmem [thread:$0]  %s161, 256, %s163, %s150, 128, 128, 8
        $region20: #{tpu_custom_call.1} parent=15 // pred_fallthru
          _
        // Predicated region
        $region21: #{tpu_custom_call.1} parent=15 // pred_check
          %p169 = pneg %p95
        $region22: #{tpu_custom_call.1} parent=15 // pred_check_branch
          %171 = sbr.rel (%p169) target = $region24
        $region23: #{tpu_custom_call.1} parent=15 // pred_region
          %s172 = sand.u32 %s85, 1
          %s173 = scalar_lea.sflag [#allocation9], %s172
          %s174 = sand.u32 %s85, 1
          %s175 = smul.addr %s174, 128
          %s176 = scalar_lea.vmem [#allocation8], %s175
          %s177 = sadd.s32 %s34, %s35
          %s178 = sld [smem:[#allocation4 + %s177]]
          %s179 = smul.u32 32, %s178
          %s181 = ssub.s32 2048, 2048
          %182 = vsyncadd %s173, %s181
          %s183 = smul.addr %s179, 2
          %s184 = sadd.s32 %s34, %s183
          %s185 = smul.addr %s184, 64
          %s186 = scalar_lea.hbm %s3, %s185
          %s187 = sshll.u32 %s176, 4
          %s188 = int_to_ptr.vmem [resolvable:$true] %s187
          %193 = dma.hbm_to_vmem [thread:$0]  %s186, 2048, %s188, %s173, 128, 64, 4
        $region24: #{tpu_custom_call.1} parent=15 // pred_fallthru
          _
      $region16: #{tpu_custom_call.1} parent=5 // pred_fallthru
        _
      %p194 = scmp.le.s32.totalorder 1, %s27
      %p195 = scmp.lt.s32.totalorder %s27, 3
      %p196 = pnand %p194, %p195
      %p197 = pneg %p196
      // Predicated region
      $region25: #{tpu_custom_call.1} parent=5 // pred_check
        _
      $region26: #{tpu_custom_call.1} parent=5 // pred_check_branch
        %199 = sbr.rel (%p196) target = $region28
      $region27: #{tpu_custom_call.1} parent=5 // pred_region
        %s200 = ssub.s32 %s27, 1
        %s201 = sand.u32 %s56, 1
        %s202 = scalar_lea.sflag [#allocation6], %s201
        %s203 = sand.u32 %s56, 1
        %s204 = smul.addr %s203, 16
        %s205 = scalar_lea.vmem [#allocation5], %s204
        // Predicated region
        $region29: #{tpu_custom_call.1} parent=27 // pred_check
          %p206 = pneg %p69
        $region30: #{tpu_custom_call.1} parent=27 // pred_check_branch
          %208 = sbr.rel (%p206) target = $region32
        $region31: #{tpu_custom_call.1} parent=27 // pred_region
          %209 = dma.done %s202, 256
        $region32: #{tpu_custom_call.1} parent=27 // pred_fallthru
          _
        %s210 = sand.u32 %s88, 1
        %s211 = scalar_lea.sflag [#allocation9], %s210
        %s212 = sand.u32 %s88, 1
        %s213 = smul.addr %s212, 128
        %s214 = scalar_lea.vmem [#allocation8], %s213
        // Predicated region
        $region33: #{tpu_custom_call.1} parent=27 // pred_check
          %p215 = pneg %p101
        $region34: #{tpu_custom_call.1} parent=27 // pred_check_branch
          %217 = sbr.rel (%p215) target = $region36
        $region35: #{tpu_custom_call.1} parent=27 // pred_region
          %218 = dma.done %s211, 2048
        $region36: #{tpu_custom_call.1} parent=27 // pred_fallthru
          _
        %s219 = sand.u32 %s56, 1
        %s220 = scalar_lea.sflag [#allocation6], %s219
        %s221 = sand.u32 %s56, 1
        %s222 = smul.addr %s221, 16
        %s223 = scalar_lea.vmem [#allocation5], %s222
        %p224 = pneg %p69
        %p225 = pneg %p66
        %s226 = sand.u32 %s88, 1
        %s227 = scalar_lea.sflag [#allocation9], %s226
        %s228 = sand.u32 %s88, 1
        %s229 = smul.addr %s228, 128
        %s230 = scalar_lea.vmem [#allocation8], %s229
        %p231 = pneg %p101
        %p232 = pneg %p98
        %p233 = pneg %p127
        %p234 = pneg %p124
        %s235 = sand.u32 %s114, 1
        %s236 = scalar_lea.sflag [#allocation7], %s235
        %s237 = sand.u32 %s114, 1
        %s238 = smul.addr %s237, 16
        %s239 = scalar_lea.vmem [#allocation10], %s238
        %s240 = sadd.s32 %s36, %s37
        %s241 = sld [smem:[#allocation4 + %s240]]
        %s242 = smul.u32 2, %s241
        %s243 = sadd.s32 %s36, %s37
        %s244 = sld [smem:[#allocation4 + %s243]]
        %s245 = smul.u32 32, %s244
        %p247 = scmp.eq.s32.totalorder %s37, 0
        // Predicated region
        $region37: #{tpu_custom_call.1} parent=27 // pred_check
          %p248 = pneg %p247
        $region38: #{tpu_custom_call.1} parent=27 // pred_check_branch
          %250 = sbr.rel (%p248) target = $region40
        $region39: #{tpu_custom_call.1} parent=27 // pred_region
          %251 = vst [vmem:[%s239] sm:$0xff] 0.0
          %252 = vst [vmem:[%s239 + $0x8] sm:$0xff] 0.0
        $region40: #{tpu_custom_call.1} parent=27 // pred_fallthru
          _
        %s253 = sld [smem:[#allocation3 + %s36]]
        %p254 = scmp.lt.s32.totalorder %s37, %s253
        // Predicated region
        $region41: #{tpu_custom_call.1} parent=27 // pred_check
          %p255 = pneg %p254
        $region42: #{tpu_custom_call.1} parent=27 // pred_check_branch
          %257 = sbr.rel (%p255) target = $region44
        $region43: #{tpu_custom_call.1} parent=27 // pred_region
          %v258 = vld [vmem:[%s239] sm:$0xff]
          %v259 = vld [vmem:[%s239 + $0x8] sm:$0xff]
          %v260 = vld [vmem:[%s205] sm:$0xff]
          %v261 = vld [vmem:[%s205 + $0x8] sm:$0xff]
          %v262 = vld [vmem:[%s214] sm:$0xf]
          %v263 = vld [vmem:[%s214 + $0x4] sm:$0xf]
          %v264 = vld [vmem:[%s214 + $0x8] sm:$0xf]
          %v265 = vld [vmem:[%s214 + $0xc] sm:$0xf]
          %v266 = vld [vmem:[%s214 + $0x10] sm:$0xf]
          %v267 = vld [vmem:[%s214 + $0x14] sm:$0xf]
          %v268 = vld [vmem:[%s214 + $0x18] sm:$0xf]
          %v269 = vld [vmem:[%s214 + $0x1c] sm:$0xf]
          %v270 = vld [vmem:[%s214 + $0x20] sm:$0xf]
          %v271 = vld [vmem:[%s214 + $0x24] sm:$0xf]
          %v272 = vld [vmem:[%s214 + $0x28] sm:$0xf]
          %v273 = vld [vmem:[%s214 + $0x2c] sm:$0xf]
          %v274 = vld [vmem:[%s214 + $0x30] sm:$0xf]
          %v275 = vld [vmem:[%s214 + $0x34] sm:$0xf]
          %v276 = vld [vmem:[%s214 + $0x38] sm:$0xf]
          %v277 = vld [vmem:[%s214 + $0x3c] sm:$0xf]
          %v278 = vld [vmem:[%s214 + $0x40] sm:$0xf]
          %v279 = vld [vmem:[%s214 + $0x44] sm:$0xf]
          %v280 = vld [vmem:[%s214 + $0x48] sm:$0xf]
          %v281 = vld [vmem:[%s214 + $0x4c] sm:$0xf]
          %v282 = vld [vmem:[%s214 + $0x50] sm:$0xf]
          %v283 = vld [vmem:[%s214 + $0x54] sm:$0xf]
          %v284 = vld [vmem:[%s214 + $0x58] sm:$0xf]
          %v285 = vld [vmem:[%s214 + $0x5c] sm:$0xf]
          %v286 = vld [vmem:[%s214 + $0x60] sm:$0xf]
          %v287 = vld [vmem:[%s214 + $0x64] sm:$0xf]
          %v288 = vld [vmem:[%s214 + $0x68] sm:$0xf]
          %v289 = vld [vmem:[%s214 + $0x6c] sm:$0xf]
          %v290 = vld [vmem:[%s214 + $0x70] sm:$0xf]
          %v291 = vld [vmem:[%s214 + $0x74] sm:$0xf]
          %v292 = vld [vmem:[%s214 + $0x78] sm:$0xf]
          %v293 = vld [vmem:[%s214 + $0x7c] sm:$0xf]
          %v296 = vunpack.c.l.b16 %v260
          %v297 = vunpack.c.h.b16 %v260
          %v298 = vunpack.c.l.b16 %v261
          %v299 = vunpack.c.h.b16 %v261
          %v300 = vpack.c.b16 %v298, %v296
          %v301 = vpack.c.b16 %v299, %v297
          %v336 = vunpack.c.l.b16 %v262
          %v337 = vunpack.c.l.b16 %v263
          %v338 = vunpack.c.l.b16 %v264
          %v339 = vunpack.c.l.b16 %v265
          %v340 = vunpack.c.l.b16 %v266
          %v341 = vunpack.c.l.b16 %v267
          %v342 = vunpack.c.l.b16 %v268
          %v343 = vunpack.c.l.b16 %v269
          %v344 = vunpack.c.l.b16 %v270
          %v345 = vunpack.c.l.b16 %v271
          %v346 = vunpack.c.l.b16 %v272
          %v347 = vunpack.c.l.b16 %v273
          %v348 = vunpack.c.l.b16 %v274
          %v349 = vunpack.c.l.b16 %v275
          %v350 = vunpack.c.l.b16 %v276
          %v351 = vunpack.c.l.b16 %v277
          %v352 = vunpack.c.l.b16 %v278
          %v353 = vunpack.c.l.b16 %v279
          %v354 = vunpack.c.l.b16 %v280
          %v355 = vunpack.c.l.b16 %v281
          %v356 = vunpack.c.l.b16 %v282
          %v357 = vunpack.c.l.b16 %v283
          %v358 = vunpack.c.l.b16 %v284
          %v359 = vunpack.c.l.b16 %v285
          %v360 = vunpack.c.l.b16 %v286
          %v361 = vunpack.c.l.b16 %v287
          %v362 = vunpack.c.l.b16 %v288
          %v363 = vunpack.c.l.b16 %v289
          %v364 = vunpack.c.l.b16 %v290
          %v365 = vunpack.c.l.b16 %v291
          %v366 = vunpack.c.l.b16 %v292
          %v367 = vunpack.c.l.b16 %v293
          %v368 = vpack.c.b16 %v337, %v336
          %v369 = vpack.c.b16 %v339, %v338
          %v370 = vpack.c.b16 %v341, %v340
          %v371 = vpack.c.b16 %v343, %v342
          %v372 = vpack.c.b16 %v345, %v344
          %v373 = vpack.c.b16 %v347, %v346
          %v374 = vpack.c.b16 %v349, %v348
          %v375 = vpack.c.b16 %v351, %v350
          %v376 = vpack.c.b16 %v353, %v352
          %v377 = vpack.c.b16 %v355, %v354
          %v378 = vpack.c.b16 %v357, %v356
          %v379 = vpack.c.b16 %v359, %v358
          %v380 = vpack.c.b16 %v361, %v360
          %v381 = vpack.c.b16 %v363, %v362
          %v382 = vpack.c.b16 %v365, %v364
          %v383 = vpack.c.b16 %v367, %v366
          %400 = vmatprep.subr.bf16.mxu0 0
          %401 = vmatpush1.bf16.msra.mxu0 %v368
          %402 = vmatprep.subr.bf16.mxu0 0
          %403 = vmatpush1.bf16.msra.mxu0 %v369
          %404 = vmatprep.subr.bf16.mxu0 0
          %405 = vmatpush1.bf16.msra.mxu0 %v370
          %406 = vmatprep.subr.bf16.mxu0 0
          %407 = vmatpush1.bf16.msra.mxu0 %v371
          %408 = vmatprep.subr.bf16.mxu0 0
          %409 = vmatpush1.bf16.msra.mxu0 %v372
          %410 = vmatprep.subr.bf16.mxu0 0
          %411 = vmatpush1.bf16.msra.mxu0 %v373
          %412 = vmatprep.subr.bf16.mxu0 0
          %413 = vmatpush1.bf16.msra.mxu0 %v374
          %414 = vmatprep.subr.bf16.mxu0 0
          %415 = vmatpush1.bf16.msra.mxu0 %v375
          %416 = vmatprep.subr.bf16.mxu0 0
          %417 = vmatpush1.bf16.msra.mxu0 %v376
          %418 = vmatprep.subr.bf16.mxu0 0
          %419 = vmatpush1.bf16.msra.mxu0 %v377
          %420 = vmatprep.subr.bf16.mxu0 0
          %421 = vmatpush1.bf16.msra.mxu0 %v378
          %422 = vmatprep.subr.bf16.mxu0 0
          %423 = vmatpush1.bf16.msra.mxu0 %v379
          %424 = vmatprep.subr.bf16.mxu0 0
          %425 = vmatpush1.bf16.msra.mxu0 %v380
          %426 = vmatprep.subr.bf16.mxu0 0
          %427 = vmatpush1.bf16.msra.mxu0 %v381
          %428 = vmatprep.subr.bf16.mxu0 0
          %429 = vmatpush1.bf16.msra.mxu0 %v382
          %430 = vmatprep.subr.bf16.mxu0 0
          %431 = vmatpush1.bf16.msra.mxu0 %v383
          %432 = vmatprep.mubr.bf16.mxu0 %v301
          %433 = vmatmul.mubr.bf16.gmra.mrb[0].mxu0 %v300
          %v434 = vpop.f32.mrb[0].mxu0
          %v435 = vadd.f32 0.0, %v434
          %v436 = vpop.f32.mrb[0].mxu0
          %v437 = vpop.f32.mrb[0].mxu0
          %v438 = vadd.f32 0.0, %v437
          %v439 = vpop.f32.mrb[0].mxu0
          %440 = vdwg.mxu0
          %v441 = vadd.f32 %v258, %v435
          %v442 = vadd.f32 %v259, %v438
          %443 = vst [vmem:[%s239] sm:$0xff] %v441
          %444 = vst [vmem:[%s239 + $0x8] sm:$0xff] %v442
        $region44: #{tpu_custom_call.1} parent=27 // pred_fallthru
          _
        %s445 = sand.u32 %s114, 1
        %s446 = scalar_lea.sflag [#allocation7], %s445
        %s447 = sand.u32 %s114, 1
        %s448 = smul.addr %s447, 16
        %s449 = scalar_lea.vmem [#allocation10], %s448
        // Predicated region
        $region45: #{tpu_custom_call.1} parent=27 // pred_check
          %p450 = pneg %p124
        $region46: #{tpu_custom_call.1} parent=27 // pred_check_branch
          %452 = sbr.rel (%p450) target = $region48
        $region47: #{tpu_custom_call.1} parent=27 // pred_region
          %s454 = ssub.s32 256, 256
          %455 = vsyncadd %s446, %s454
          %s456 = smul.addr %s36, 128
          %s457 = scalar_lea.hbm %s4, %s456
          %s458 = sshll.u32 %s449, 4
          %s459 = int_to_ptr.vmem [resolvable:$true] %s458
          %464 = dma.vmem_to_hbm [thread:$0]  %s459, 256, %s457, %s446, 128, 256, 8
        $region48: #{tpu_custom_call.1} parent=27 // pred_fallthru
          _
      $region28: #{tpu_custom_call.1} parent=5 // pred_fallthru
        _
      %p465 = scmp.le.s32.totalorder 2, %s27
      // Predicated region
      $region49: #{tpu_custom_call.1} parent=5 // pred_check
        %p466 = pneg %p465
      $region50: #{tpu_custom_call.1} parent=5 // pred_check_branch
        %468 = sbr.rel (%p466) target = $region52
      $region51: #{tpu_custom_call.1} parent=5 // pred_region
        %s469 = ssub.s32 %s27, 2
        // Predicated region
        $region53: #{tpu_custom_call.1} parent=51 // pred_check
          %p470 = pneg %p130
        $region54: #{tpu_custom_call.1} parent=51 // pred_check_branch
          %472 = sbr.rel (%p470) target = $region56
        $region55: #{tpu_custom_call.1} parent=51 // pred_region
          %s473 = sand.u32 %s115, 1
          %s474 = scalar_lea.sflag [#allocation7], %s473
          %s475 = sand.u32 %s115, 1
          %s476 = smul.addr %s475, 16
          %s477 = scalar_lea.vmem [#allocation10], %s476
          %478 = dma.done %s474, 256
        $region56: #{tpu_custom_call.1} parent=51 // pred_fallthru
          _
      $region52: #{tpu_custom_call.1} parent=5 // pred_fallthru
        _
    $region6: #{tpu_custom_call.1} parent=1 // loop_footer
      %s31 = sadd.s32 1, %s27
    $region7: #{tpu_custom_call.1} parent=1 // loop_footer_branch
      %26 = sbr.rel target = $region3
    $region8: #{tpu_custom_call.1} parent=1 // loop_exit
      _
    %479 = vsyncpa [#allocation6], 1
    %s480 = scalar_lea.sflag [#allocation6], 1
    %481 = vsyncpa %s480, 1
    %482 = vsyncpa [#allocation9], 1
    %s483 = scalar_lea.sflag [#allocation9], 1
    %484 = vsyncpa %s483, 1
    %485 = vsyncpa [#allocation7], 1
    %s486 = scalar_lea.sflag [#allocation7], 1
    %487 = vsyncpa %s486, 1

</llo_original>
